<compile_context>
chip_gen: v7x
topology: tpu7x:2x2x1
jax: 0.10.0
libtpu: 0.0.40
codegen_flags: <defaults>
</compile_context>

<pallas_src>
from typing import Dict, List

import jax
import jax.numpy as jnp
from jax import lax
from jax.experimental import pallas as pl
from jax.experimental.pallas import tpu as pltpu

# ---------------------------------------------------------------------------
# model hyper-parameters (synthetic, deterministic)
# ---------------------------------------------------------------------------
VOWEL_VOCAB = 10
EMBED_DIM = 8
FEAT_DIM = 8
HIDDEN = 32
OUT_DIM = 4                      # accent_start / end / phrase_start / phrase_end
D_IN = EMBED_DIM + FEAT_DIM

# static padded sizes (compile once for any utterance batch)
M_PAD = 128                      # moras per utterance -> lane axis of the output
F_PAD = 128                      # frames per utterance -> one-hot gather contraction
VOCAB_PAD = 16                   # embedding rows padded once at init

COMPUTE_DTYPE = jnp.bfloat16     # MXU-native on v6e/v7x; accumulation stays f32


# ---------------------------------------------------------------------------
# Pallas kernel: fused embedding lookup + frame gather + 2-layer MLP
# (one grid step = one utterance; everything transposed: moras on lanes)
# ---------------------------------------------------------------------------
def _fused_kernel(vowel_ref, mora_ref, feat_ref, emb_ref,
                  w1_ref, b1_ref, w2_ref, b2_ref, o_ref):
    vowel = vowel_ref[0]                    # (1, M_PAD) int32
    mora = mora_ref[0]                      # (1, M_PAD) int32
    feat_t = feat_ref[0]                    # (FEAT_DIM, F_PAD) bf16

    # Gathers as one-hot matmuls (exact in bf16, runs on the MXU).
    vocab_iota = lax.broadcasted_iota(jnp.int32, (VOCAB_PAD, M_PAD), 0)
    onehot_v = (vocab_iota == vowel).astype(COMPUTE_DTYPE)        # (VOCAB_PAD, M_PAD)
    frame_iota = lax.broadcasted_iota(jnp.int32, (F_PAD, M_PAD), 0)
    onehot_f = (frame_iota == mora).astype(COMPUTE_DTYPE)         # (F_PAD, M_PAD)

    emb_t = jnp.dot(emb_ref[...], onehot_v,
                    preferred_element_type=jnp.float32)           # (EMBED_DIM, M_PAD)
    fm_t = jnp.dot(feat_t, onehot_f,
                   preferred_element_type=jnp.float32)            # (FEAT_DIM, M_PAD)
    x_t = jnp.concatenate([emb_t, fm_t], axis=0).astype(COMPUTE_DTYPE)  # (D_IN, M_PAD)

    h_t = jnp.dot(w1_ref[...], x_t,
                  preferred_element_type=jnp.float32) + b1_ref[...]     # (HIDDEN, M_PAD)
    h_t = jnp.maximum(h_t, 0.0).astype(COMPUTE_DTYPE)

    out_t = jnp.dot(w2_ref[...], h_t,
                    preferred_element_type=jnp.float32) + b2_ref[...]   # (OUT_DIM, M_PAD)
    o_ref[0] = out_t                                                    # lane-dense store


def _batched_predictor_impl(vowel_ids, mora_ids, feature_t, kp):
    b = vowel_ids.shape[0]
    grid_spec = pltpu.PrefetchScalarGridSpec(
        num_scalar_prefetch=0,
        grid=(b,),
        in_specs=[
            pl.BlockSpec((1, 1, M_PAD), lambda i: (i, 0, 0)),          # vowel ids
            pl.BlockSpec((1, 1, M_PAD), lambda i: (i, 0, 0)),          # mora index
            pl.BlockSpec((1, FEAT_DIM, F_PAD), lambda i: (i, 0, 0)),   # feature^T
            pl.BlockSpec((EMBED_DIM, VOCAB_PAD), lambda i: (0, 0)),    # embedding^T
            pl.BlockSpec((HIDDEN, D_IN), lambda i: (0, 0)),            # W1^T
            pl.BlockSpec((HIDDEN, 1), lambda i: (0, 0)),               # b1
            pl.BlockSpec((OUT_DIM, HIDDEN), lambda i: (0, 0)),         # W2^T
            pl.BlockSpec((OUT_DIM, 1), lambda i: (0, 0)),              # b2
        ],
        out_specs=pl.BlockSpec((1, OUT_DIM, M_PAD), lambda i: (i, 0, 0)),
    )
    return pl.pallas_call(
        _fused_kernel,
        out_shape=jax.ShapeDtypeStruct((b, OUT_DIM, M_PAD), jnp.float32),
        grid_spec=grid_spec,
        compiler_params=pltpu.CompilerParams(
            dimension_semantics=("parallel",)),   # batch axis -> both TCs on v7x
    )(vowel_ids, mora_ids, feature_t,
      kp["emb_t"], kp["w1_t"], kp["b1_t"], kp["w2_t"], kp["b2_t"])


_batched_predictor = jax.jit(_batched_predictor_impl)


# ---------------------------------------------------------------------------
# parameter init (f32 "logical" params) + one-time kernel-layout preparation
# ---------------------------------------------------------------------------
def init_params(key: jax.Array) -> Dict[str, jax.Array]:
    k_emb, k_w1, k_w2 = jax.random.split(key, 3)
    return dict(
        embedding=jax.random.normal(k_emb, (VOWEL_VOCAB, EMBED_DIM), jnp.float32) * 0.1,
        w1=jax.random.normal(k_w1, (D_IN, HIDDEN), jnp.float32) * 0.1,
        b1=jnp.zeros((HIDDEN,), jnp.float32),
        w2=jax.random.normal(k_w2, (HIDDEN, OUT_DIM), jnp.float32) * 0.1,
        b2=jnp.zeros((OUT_DIM,), jnp.float32),
    )


def prepare_kernel_params(params: Dict[str, jax.Array]) -> Dict[str, jax.Array]:
    # pad / transpose / cast once, outside the per-call graph
    emb_pad = jnp.zeros((VOCAB_PAD, EMBED_DIM), jnp.float32).at[:VOWEL_VOCAB].set(
        params["embedding"])
    return dict(
        emb_t=emb_pad.T.astype(COMPUTE_DTYPE),                   # (EMBED_DIM, VOCAB_PAD)
        w1_t=params["w1"].T.astype(COMPUTE_DTYPE),               # (HIDDEN, D_IN)
        b1_t=params["b1"].reshape(HIDDEN, 1).astype(jnp.float32),
        w2_t=params["w2"].T.astype(COMPUTE_DTYPE),               # (OUT_DIM, HIDDEN)
        b2_t=params["b2"].reshape(OUT_DIM, 1).astype(jnp.float32),
    )


# ---------------------------------------------------------------------------
# Generator.forward equivalent: one batched kernel launch for all utterances
# ---------------------------------------------------------------------------
def generator_forward(
    vowel_list: List[jax.Array],
    feature_list: List[jax.Array],
    mora_index_list: List[jax.Array],
    kernel_params: Dict[str, jax.Array],
) -> List[Dict[str, jax.Array]]:
    lengths = [int(v.shape[0]) for v in vowel_list]
    for v, f, mi in zip(vowel_list, feature_list, mora_index_list):
        assert v.shape[0] <= M_PAD and f.shape[0] <= F_PAD and mi.shape[0] <= M_PAD

    def pad_ids(ids: jax.Array) -> jax.Array:
        m = ids.shape[0]
        return jnp.full((1, M_PAD), -1, jnp.int32).at[0, :m].set(ids.astype(jnp.int32))

    def pad_feat_t(f: jax.Array) -> jax.Array:
        n = f.shape[0]
        return jnp.zeros((FEAT_DIM, F_PAD), COMPUTE_DTYPE).at[:, :n].set(
            f.T.astype(COMPUTE_DTYPE))

    vowel_ids = jnp.stack([pad_ids(v) for v in vowel_list], axis=0)        # (B,1,M_PAD)
    mora_ids = jnp.stack([pad_ids(m) for m in mora_index_list], axis=0)    # (B,1,M_PAD)
    feature_t = jnp.stack([pad_feat_t(f) for f in feature_list], axis=0)   # (B,FEAT,F_PAD)

    out = _batched_predictor(vowel_ids, mora_ids, feature_t, kernel_params)  # (B,4,M_PAD)

    outputs = []
    for i, m in enumerate(lengths):
        outputs.append(dict(
            accent_start=out[i, 0, :m][None],          # (1, M) — matches output[:, :, 0]
            accent_end=out[i, 1, :m][None],
            accent_phrase_start=out[i, 2, :m][None],
            accent_phrase_end=out[i, 3, :m][None],
        ))
    return outputs


# ---------------------------------------------------------------------------
# demo + reference check
# ---------------------------------------------------------------------------
if __name__ == "__main__":
    key = jax.random.PRNGKey(0)
    k_params, k1, k2, k3, k4 = jax.random.split(key, 5)
    params = init_params(k_params)
    kernel_params = prepare_kernel_params(params)

    # two utterances of different lengths
    vowel_list = [
        jax.random.randint(k1, (8,), 0, VOWEL_VOCAB, dtype=jnp.int32),
        jax.random.randint(k2, (6,), 0, VOWEL_VOCAB, dtype=jnp.int32),
    ]
    feature_list = [
        jax.random.normal(k3, (16, FEAT_DIM), jnp.float32),
        jax.random.normal(k4, (12, FEAT_DIM), jnp.float32),
    ]
    mora_index_list = [
        jnp.array([0, 2, 4, 6, 8, 10, 12, 14], jnp.int32),
        jnp.array([0, 2, 4, 6, 8, 10], jnp.int32),
    ]

    outputs = generator_forward(vowel_list, feature_list, mora_index_list, kernel_params)

    # plain-JAX f32 reference (kernel uses bf16 operands -> loosened tolerance)
    for vowel, feature, mora_index, out in zip(
        vowel_list, feature_list, mora_index_list, outputs
    ):
        emb = params["embedding"][vowel]
        feat_mora = feature[mora_index]
        x = jnp.concatenate([emb, feat_mora], axis=-1)
        h = jnp.maximum(x @ params["w1"] + params["b1"], 0.0)
        ref = (h @ params["w2"] + params["b2"])[None]                      # (1, M, 4)
        got = jnp.stack(
            [out["accent_start"], out["accent_end"],
             out["accent_phrase_start"], out["accent_phrase_end"]],
            axis=-1,
        )
        assert got.shape == ref.shape, (got.shape, ref.shape)
        assert jnp.max(jnp.abs(got - ref)) < 2e-2, "mismatch vs reference"

    for out in outputs:
        for v in out.values():
            jax.block_until_ready(v)

    print("KERNEL_OK")
</pallas_src>

<mosaic_0001>
module attributes {stable_mosaic.version = 11 : i64} {
  func.func @_fused_kernel(%arg0: i32, %arg1: memref<1x1x128xi32, #tpu.memory_space<vmem>>, %arg2: memref<1x1x128xi32, #tpu.memory_space<vmem>>, %arg3: memref<1x8x128xbf16, #tpu.memory_space<vmem>>, %arg4: memref<8x16xbf16, #tpu.memory_space<vmem>>, %arg5: memref<32x16xbf16, #tpu.memory_space<vmem>>, %arg6: memref<32x1xf32, #tpu.memory_space<vmem>>, %arg7: memref<4x32xbf16, #tpu.memory_space<vmem>>, %arg8: memref<4x1xf32, #tpu.memory_space<vmem>>, %arg9: memref<1x4x128xf32, #tpu.memory_space<vmem>>) attributes {dimension_semantics = [#tpu.dimension_semantics<parallel>], iteration_bounds = array<i64: 2>, scalar_prefetch = 0 : i64, scratch_operands = 0 : i64, tpu.core_type = #tpu.core_type<tc>, window_params = [{transform_indices = @transform_0, window_bounds = array<i64: 1, 1, 128>}, {transform_indices = @transform_1, window_bounds = array<i64: 1, 1, 128>}, {transform_indices = @transform_2, window_bounds = array<i64: 1, 8, 128>}, {pipeline_mode = #tpu.pipeline_mode<synchronous>, transform_indices = @transform_3, window_bounds = array<i64: 8, 16>}, {pipeline_mode = #tpu.pipeline_mode<synchronous>, transform_indices = @transform_4, window_bounds = array<i64: 32, 16>}, {pipeline_mode = #tpu.pipeline_mode<synchronous>, transform_indices = @transform_5, window_bounds = array<i64: 32, 1>}, {pipeline_mode = #tpu.pipeline_mode<synchronous>, transform_indices = @transform_6, window_bounds = array<i64: 4, 32>}, {pipeline_mode = #tpu.pipeline_mode<synchronous>, transform_indices = @transform_7, window_bounds = array<i64: 4, 1>}, {transform_indices = @transform_8, window_bounds = array<i64: 1, 4, 128>}]} {
    %c0 = arith.constant 0 : index
    %c0_0 = arith.constant 0 : index
    %c0_1 = arith.constant 0 : index
    %0 = vector.load %arg1[%c0, %c0_0, %c0_1] : memref<1x1x128xi32, #tpu.memory_space<vmem>>, vector<1x1x128xi32>
    %1 = vector.shape_cast %0 : vector<1x1x128xi32> to vector<1x128xi32>
    %c0_2 = arith.constant 0 : index
    %c0_3 = arith.constant 0 : index
    %c0_4 = arith.constant 0 : index
    %2 = vector.load %arg2[%c0_2, %c0_3, %c0_4] : memref<1x1x128xi32, #tpu.memory_space<vmem>>, vector<1x1x128xi32>
    %3 = vector.shape_cast %2 : vector<1x1x128xi32> to vector<1x128xi32>
    %c0_5 = arith.constant 0 : index
    %c0_6 = arith.constant 0 : index
    %c0_7 = arith.constant 0 : index
    %4 = vector.load %arg3[%c0_5, %c0_6, %c0_7] : memref<1x8x128xbf16, #tpu.memory_space<vmem>>, vector<1x8x128xbf16>
    %5 = vector.shape_cast %4 : vector<1x8x128xbf16> to vector<8x128xbf16>
    %6 = tpu.iota {dimensions = array<i32: 0>} : vector<16x128xi32>
    %7 = vector.broadcast %1 : vector<1x128xi32> to vector<16x128xi32>
    %8 = arith.cmpi eq, %6, %7 : vector<16x128xi32>
    %9 = arith.extui %8 : vector<16x128xi1> to vector<16x128xi32>
    %10 = arith.sitofp %9 : vector<16x128xi32> to vector<16x128xf32>
    %11 = arith.truncf %10 : vector<16x128xf32> to vector<16x128xbf16>
    %12 = tpu.iota {dimensions = array<i32: 0>} : vector<128x128xi32>
    %13 = vector.broadcast %3 : vector<1x128xi32> to vector<128x128xi32>
    %14 = arith.cmpi eq, %12, %13 : vector<128x128xi32>
    %15 = arith.extui %14 : vector<128x128xi1> to vector<128x128xi32>
    %16 = arith.sitofp %15 : vector<128x128xi32> to vector<128x128xf32>
    %17 = arith.truncf %16 : vector<128x128xf32> to vector<128x128xbf16>
    %c0_8 = arith.constant 0 : index
    %c0_9 = arith.constant 0 : index
    %18 = vector.load %arg4[%c0_8, %c0_9] : memref<8x16xbf16, #tpu.memory_space<vmem>>, vector<8x16xbf16>
    %cst = arith.constant dense<0.000000e+00> : vector<8x128xf32>
    %19 = tpu.matmul %18, %11, %cst {dimension_numbers = #tpu.dot_dimension_numbers<[1], [0], [0], [1], [0, 0, 1, 1], [], []>} : vector<8x16xbf16>, vector<16x128xbf16>, vector<8x128xf32> -> vector<8x128xf32>
    %cst_10 = arith.constant dense<0.000000e+00> : vector<8x128xf32>
    %20 = tpu.matmul %5, %17, %cst_10 {dimension_numbers = #tpu.dot_dimension_numbers<[1], [0], [0], [1], [0, 0, 1, 1], [], []>} : vector<8x128xbf16>, vector<128x128xbf16>, vector<8x128xf32> -> vector<8x128xf32>
    %21 = tpu.concatenate %19, %20 in 0 : vector<8x128xf32>, vector<8x128xf32> -> vector<16x128xf32>
    %22 = arith.truncf %21 : vector<16x128xf32> to vector<16x128xbf16>
    %c0_11 = arith.constant 0 : index
    %c0_12 = arith.constant 0 : index
    %23 = vector.load %arg5[%c0_11, %c0_12] : memref<32x16xbf16, #tpu.memory_space<vmem>>, vector<32x16xbf16>
    %cst_13 = arith.constant dense<0.000000e+00> : vector<32x128xf32>
    %24 = tpu.matmul %23, %22, %cst_13 {dimension_numbers = #tpu.dot_dimension_numbers<[1], [0], [0], [1], [0, 0, 1, 1], [], []>} : vector<32x16xbf16>, vector<16x128xbf16>, vector<32x128xf32> -> vector<32x128xf32>
    %c0_14 = arith.constant 0 : index
    %c0_15 = arith.constant 0 : index
    %25 = vector.load %arg6[%c0_14, %c0_15] : memref<32x1xf32, #tpu.memory_space<vmem>>, vector<32x1xf32>
    %26 = vector.broadcast %25 : vector<32x1xf32> to vector<32x128xf32>
    %27 = arith.addf %24, %26 : vector<32x128xf32>
    %cst_16 = arith.constant 0.000000e+00 : f32
    %28 = vector.broadcast %cst_16 : f32 to vector<32x128xf32>
    %29 = arith.maximumf %27, %28 : vector<32x128xf32>
    %30 = arith.truncf %29 : vector<32x128xf32> to vector<32x128xbf16>
    %c0_17 = arith.constant 0 : index
    %c0_18 = arith.constant 0 : index
    %31 = vector.load %arg7[%c0_17, %c0_18] : memref<4x32xbf16, #tpu.memory_space<vmem>>, vector<4x32xbf16>
    %cst_19 = arith.constant dense<0.000000e+00> : vector<4x128xf32>
    %32 = tpu.matmul %31, %30, %cst_19 {dimension_numbers = #tpu.dot_dimension_numbers<[1], [0], [0], [1], [0, 0, 1, 1], [], []>} : vector<4x32xbf16>, vector<32x128xbf16>, vector<4x128xf32> -> vector<4x128xf32>
    %c0_20 = arith.constant 0 : index
    %c0_21 = arith.constant 0 : index
    %33 = vector.load %arg8[%c0_20, %c0_21] : memref<4x1xf32, #tpu.memory_space<vmem>>, vector<4x1xf32>
    %34 = vector.broadcast %33 : vector<4x1xf32> to vector<4x128xf32>
    %35 = arith.addf %32, %34 : vector<4x128xf32>
    %c0_22 = arith.constant 0 : index
    %c0_23 = arith.constant 0 : index
    %c0_24 = arith.constant 0 : index
    %36 = vector.load %arg9[%c0_22, %c0_23, %c0_24] : memref<1x4x128xf32, #tpu.memory_space<vmem>>, vector<1x4x128xf32>
    %37 = vector.shape_cast %36 : vector<1x4x128xf32> to vector<4x128xf32>
    %38 = vector.shape_cast %35 : vector<4x128xf32> to vector<1x4x128xf32>
    tpu.vector_store %arg9[%c0_22, %c0_23, %c0_24], %38 {strides = array<i32>} : memref<1x4x128xf32, #tpu.memory_space<vmem>>, vector<1x4x128xf32>,
    return
  }
  func.func @transform_0(%arg0: i32) -> (i32, i32, i32) {
    %c0_i32 = arith.constant 0 : i32
    %c0_i32_0 = arith.constant 0 : i32
    %c0_i32_1 = arith.constant 0 : i32
    return %arg0, %c0_i32, %c0_i32_0 : i32, i32, i32
  }
  func.func @transform_1(%arg0: i32) -> (i32, i32, i32) {
    %c0_i32 = arith.constant 0 : i32
    %c0_i32_0 = arith.constant 0 : i32
    %c0_i32_1 = arith.constant 0 : i32
    return %arg0, %c0_i32, %c0_i32_0 : i32, i32, i32
  }
  func.func @transform_2(%arg0: i32) -> (i32, i32, i32) {
    %c0_i32 = arith.constant 0 : i32
    %c0_i32_0 = arith.constant 0 : i32
    %c0_i32_1 = arith.constant 0 : i32
    return %arg0, %c0_i32, %c0_i32_0 : i32, i32, i32
  }
  func.func @transform_3(%arg0: i32) -> (i32, i32) {
    %c0_i32 = arith.constant 0 : i32
    %c0_i32_0 = arith.constant 0 : i32
    %c0_i32_1 = arith.constant 0 : i32
    return %c0_i32, %c0_i32_0 : i32, i32
  }
  func.func @transform_4(%arg0: i32) -> (i32, i32) {
    %c0_i32 = arith.constant 0 : i32
    %c0_i32_0 = arith.constant 0 : i32
    %c0_i32_1 = arith.constant 0 : i32
    return %c0_i32, %c0_i32_0 : i32, i32
  }
  func.func @transform_5(%arg0: i32) -> (i32, i32) {
    %c0_i32 = arith.constant 0 : i32
    %c0_i32_0 = arith.constant 0 : i32
    %c0_i32_1 = arith.constant 0 : i32
    return %c0_i32, %c0_i32_0 : i32, i32
  }
  func.func @transform_6(%arg0: i32) -> (i32, i32) {
    %c0_i32 = arith.constant 0 : i32
    %c0_i32_0 = arith.constant 0 : i32
    %c0_i32_1 = arith.constant 0 : i32
    return %c0_i32, %c0_i32_0 : i32, i32
  }
  func.func @transform_7(%arg0: i32) -> (i32, i32) {
    %c0_i32 = arith.constant 0 : i32
    %c0_i32_0 = arith.constant 0 : i32
    %c0_i32_1 = arith.constant 0 : i32
    return %c0_i32, %c0_i32_0 : i32, i32
  }
  func.func @transform_8(%arg0: i32) -> (i32, i32, i32) {
    %c0_i32 = arith.constant 0 : i32
    %c0_i32_0 = arith.constant 0 : i32
    %c0_i32_1 = arith.constant 0 : i32
    return %arg0, %c0_i32, %c0_i32_0 : i32, i32, i32
  }
}

</mosaic_0001>

<llo_original>
// kernel: _batched_predictor_impl.1
$region0: #{_batched_predictor_impl.1}
  #allocation0 [shape = 'u32[]', space=smem, size = 0x4, offset = 0x4, fixed_abs, tag = 'smem constant byte address 0x4 - core index']
  #allocation1 [shape = 'u32[144,128]{1,0:T(1,128)}', space=vmem, size = 0x12000, scoped, tag = 'internal scratch']
  %s0 = inlined_call_operand.vmem [shape: s32[2,1,128], index: 0, kind: input, shape index: {}]
  %s1 = inlined_call_operand.vmem [shape: s32[2,1,128], index: 1, kind: input, shape index: {}]
  %s2 = inlined_call_operand.vmem [shape: bf16[2,8,128], index: 2, kind: input, shape index: {}]
  %s3 = inlined_call_operand.vmem [shape: bf16[8,16], index: 3, kind: input, shape index: {}]
  %s4 = inlined_call_operand.vmem [shape: bf16[32,16], index: 4, kind: input, shape index: {}]
  %s5 = inlined_call_operand.vmem [shape: f32[32,1], index: 5, kind: input, shape index: {}]
  %s6 = inlined_call_operand.vmem [shape: bf16[4,32], index: 6, kind: input, shape index: {}]
  %s7 = inlined_call_operand.vmem [shape: f32[4,1], index: 7, kind: input, shape index: {}]
  %s8 = inlined_call_operand.hbm [shape: f32[2,4,128], index: 8, kind: output, shape index: {}]
  %s9 = sld [smem:[#allocation0]]
  $region65: #{_batched_predictor_impl.1} parent=0
    _
  %s11 = ssub.s32 1, %s9
  %s12 = scalar_select 0, %s11, %s9
  $region1: #{_batched_predictor_impl.1} parent=0
    #allocation2 [shape = 'u8[4096]{0}', space=vmem, size = 0x1000, scoped, tag = 'output window, operand 0']
    #allocation3 [shape = 's32[2]{0}', space=sflag, size = 0x8, scoped, tag = 'scoped memory for _batched_predictor_impl.1']
    %13 = vsyncpa [#allocation3], 0
    %s14 = scalar_lea.sflag [#allocation3], 1
    %15 = vsyncpa %s14, 0
    loop: start=0, step=1, limit=4
    $region2: #{_batched_predictor_impl.1} parent=1 // loop_pre_header
      _
    $region3: #{_batched_predictor_impl.1} parent=1 // loop_header
      %s17 = sphi 0, %s21
      %p18 = scmp.ge.s32.totalorder %s17, 4
      %s27 = sphi 0, %s29
      %s30 = sphi 0, %s27
      %s31 = sphi 0, %s30
      %s47 = sphi 0, %s31
      %s53 = sphi 0, %s55
      %s56 = sphi 0, %s53
      %s57 = sphi 0, %s56
      %s73 = sphi 0, %s57
      %s79 = sphi 0, %s81
      %s82 = sphi 0, %s79
      %s83 = sphi 0, %s82
      %s99 = sphi 0, %s83
      %s103 = sphi 0, %s103
      %s105 = sphi 0, %s103
      %s106 = sphi 0, %s105
      %s120 = sphi 0, %s106
      %s124 = sphi 0, %s124
      %s126 = sphi 0, %s124
      %s127 = sphi 0, %s126
      %s141 = sphi 0, %s127
      %s145 = sphi 0, %s145
      %s147 = sphi 0, %s145
      %s148 = sphi 0, %s147
      %s162 = sphi 0, %s148
      %s166 = sphi 0, %s166
      %s168 = sphi 0, %s166
      %s169 = sphi 0, %s168
      %s183 = sphi 0, %s169
      %s187 = sphi 0, %s187
      %s189 = sphi 0, %s187
      %s190 = sphi 0, %s189
      %s204 = sphi 0, %s190
      %s210 = sphi 0, %s212
      %s213 = sphi 0, %s210
      %s214 = sphi 0, %s213
      %s230 = sphi 0, %s214
    $region4: #{_batched_predictor_impl.1} parent=1 // loop_header_branch
      %20 = sbr.rel (%p18) target = $region8
    $region5: #{_batched_predictor_impl.1} parent=1 // loop_body
      %s22 = ssub.s32 %s17, 1
      %s23 = ssub.s32 %s17, 2
      %s24 = sadd.s32 %s17, 1
      %s25 = ssub.s32 %s17, %s24
      %p26 = scmp.eq.s32.totalorder %s25, 0
      %s28 = sadd.s32 %s27, 1
      %s29 = scalar_select %p26, %s27, %s28
      %p32 = pneg %p26
      %p33 = scmp.eq.s32.totalorder %s17, 1
      %p34 = por %p32, %p33
      %p35 = scmp.ne.s32.totalorder %s27, %s30
      %p36 = scmp.eq.s32.totalorder %s17, 0
      %p37 = por %p35, %p36
      %p38 = scmp.ne.s32.totalorder %s27, %s30
      %p39 = scmp.eq.s32.totalorder %s22, 1
      %p40 = por %p38, %p39
      %p41 = scmp.ne.s32.totalorder %s30, %s31
      %p42 = scmp.eq.s32.totalorder %s22, 0
      %p43 = por %p41, %p42
      %p44 = scmp.ne.s32.totalorder %s30, %s31
      %p45 = scmp.eq.s32.totalorder %s23, 1
      %p46 = por %p44, %p45
      %p48 = scmp.ne.s32.totalorder %s31, %s47
      %p49 = scmp.eq.s32.totalorder %s23, 0
      %p50 = por %p48, %p49
      %s51 = ssub.s32 %s17, %s24
      %p52 = scmp.eq.s32.totalorder %s51, 0
      %s54 = sadd.s32 %s53, 1
      %s55 = scalar_select %p52, %s53, %s54
      %p58 = pneg %p52
      %p59 = scmp.eq.s32.totalorder %s17, 1
      %p60 = por %p58, %p59
      %p61 = scmp.ne.s32.totalorder %s53, %s56
      %p62 = scmp.eq.s32.totalorder %s17, 0
      %p63 = por %p61, %p62
      %p64 = scmp.ne.s32.totalorder %s53, %s56
      %p65 = scmp.eq.s32.totalorder %s22, 1
      %p66 = por %p64, %p65
      %p67 = scmp.ne.s32.totalorder %s56, %s57
      %p68 = scmp.eq.s32.totalorder %s22, 0
      %p69 = por %p67, %p68
      %p70 = scmp.ne.s32.totalorder %s56, %s57
      %p71 = scmp.eq.s32.totalorder %s23, 1
      %p72 = por %p70, %p71
      %p74 = scmp.ne.s32.totalorder %s57, %s73
      %p75 = scmp.eq.s32.totalorder %s23, 0
      %p76 = por %p74, %p75
      %s77 = ssub.s32 %s17, %s24
      %p78 = scmp.eq.s32.totalorder %s77, 0
      %s80 = sadd.s32 %s79, 1
      %s81 = scalar_select %p78, %s79, %s80
      %p84 = pneg %p78
      %p85 = scmp.eq.s32.totalorder %s17, 1
      %p86 = por %p84, %p85
      %p87 = scmp.ne.s32.totalorder %s79, %s82
      %p88 = scmp.eq.s32.totalorder %s17, 0
      %p89 = por %p87, %p88
      %p90 = scmp.ne.s32.totalorder %s79, %s82
      %p91 = scmp.eq.s32.totalorder %s22, 1
      %p92 = por %p90, %p91
      %p93 = scmp.ne.s32.totalorder %s82, %s83
      %p94 = scmp.eq.s32.totalorder %s22, 0
      %p95 = por %p93, %p94
      %p96 = scmp.ne.s32.totalorder %s82, %s83
      %p97 = scmp.eq.s32.totalorder %s23, 1
      %p98 = por %p96, %p97
      %p100 = scmp.ne.s32.totalorder %s83, %s99
      %p101 = scmp.eq.s32.totalorder %s23, 0
      %p102 = por %p100, %p101
      %s104 = sadd.s32 %s103, 1
      %p107 = scmp.eq.s32.totalorder %s17, 1
      %p108 = scmp.ne.s32.totalorder %s103, %s105
      %p109 = scmp.eq.s32.totalorder %s17, 0
      %p110 = por %p108, %p109
      %p111 = scmp.ne.s32.totalorder %s103, %s105
      %p112 = scmp.eq.s32.totalorder %s22, 1
      %p113 = por %p111, %p112
      %p114 = scmp.ne.s32.totalorder %s105, %s106
      %p115 = scmp.eq.s32.totalorder %s22, 0
      %p116 = por %p114, %p115
      %p117 = scmp.ne.s32.totalorder %s105, %s106
      %p118 = scmp.eq.s32.totalorder %s23, 1
      %p119 = por %p117, %p118
      %p121 = scmp.ne.s32.totalorder %s106, %s120
      %p122 = scmp.eq.s32.totalorder %s23, 0
      %p123 = por %p121, %p122
      %s125 = sadd.s32 %s124, 1
      %p128 = scmp.eq.s32.totalorder %s17, 1
      %p129 = scmp.ne.s32.totalorder %s124, %s126
      %p130 = scmp.eq.s32.totalorder %s17, 0
      %p131 = por %p129, %p130
      %p132 = scmp.ne.s32.totalorder %s124, %s126
      %p133 = scmp.eq.s32.totalorder %s22, 1
      %p134 = por %p132, %p133
      %p135 = scmp.ne.s32.totalorder %s126, %s127
      %p136 = scmp.eq.s32.totalorder %s22, 0
      %p137 = por %p135, %p136
      %p138 = scmp.ne.s32.totalorder %s126, %s127
      %p139 = scmp.eq.s32.totalorder %s23, 1
      %p140 = por %p138, %p139
      %p142 = scmp.ne.s32.totalorder %s127, %s141
      %p143 = scmp.eq.s32.totalorder %s23, 0
      %p144 = por %p142, %p143
      %s146 = sadd.s32 %s145, 1
      %p149 = scmp.eq.s32.totalorder %s17, 1
      %p150 = scmp.ne.s32.totalorder %s145, %s147
      %p151 = scmp.eq.s32.totalorder %s17, 0
      %p152 = por %p150, %p151
      %p153 = scmp.ne.s32.totalorder %s145, %s147
      %p154 = scmp.eq.s32.totalorder %s22, 1
      %p155 = por %p153, %p154
      %p156 = scmp.ne.s32.totalorder %s147, %s148
      %p157 = scmp.eq.s32.totalorder %s22, 0
      %p158 = por %p156, %p157
      %p159 = scmp.ne.s32.totalorder %s147, %s148
      %p160 = scmp.eq.s32.totalorder %s23, 1
      %p161 = por %p159, %p160
      %p163 = scmp.ne.s32.totalorder %s148, %s162
      %p164 = scmp.eq.s32.totalorder %s23, 0
      %p165 = por %p163, %p164
      %s167 = sadd.s32 %s166, 1
      %p170 = scmp.eq.s32.totalorder %s17, 1
      %p171 = scmp.ne.s32.totalorder %s166, %s168
      %p172 = scmp.eq.s32.totalorder %s17, 0
      %p173 = por %p171, %p172
      %p174 = scmp.ne.s32.totalorder %s166, %s168
      %p175 = scmp.eq.s32.totalorder %s22, 1
      %p176 = por %p174, %p175
      %p177 = scmp.ne.s32.totalorder %s168, %s169
      %p178 = scmp.eq.s32.totalorder %s22, 0
      %p179 = por %p177, %p178
      %p180 = scmp.ne.s32.totalorder %s168, %s169
      %p181 = scmp.eq.s32.totalorder %s23, 1
      %p182 = por %p180, %p181
      %p184 = scmp.ne.s32.totalorder %s169, %s183
      %p185 = scmp.eq.s32.totalorder %s23, 0
      %p186 = por %p184, %p185
      %s188 = sadd.s32 %s187, 1
      %p191 = scmp.eq.s32.totalorder %s17, 1
      %p192 = scmp.ne.s32.totalorder %s187, %s189
      %p193 = scmp.eq.s32.totalorder %s17, 0
      %p194 = por %p192, %p193
      %p195 = scmp.ne.s32.totalorder %s187, %s189
      %p196 = scmp.eq.s32.totalorder %s22, 1
      %p197 = por %p195, %p196
      %p198 = scmp.ne.s32.totalorder %s189, %s190
      %p199 = scmp.eq.s32.totalorder %s22, 0
      %p200 = por %p198, %p199
      %p201 = scmp.ne.s32.totalorder %s189, %s190
      %p202 = scmp.eq.s32.totalorder %s23, 1
      %p203 = por %p201, %p202
      %p205 = scmp.ne.s32.totalorder %s190, %s204
      %p206 = scmp.eq.s32.totalorder %s23, 0
      %p207 = por %p205, %p206
      %s208 = ssub.s32 %s17, %s24
      %p209 = scmp.eq.s32.totalorder %s208, 0
      %s211 = sadd.s32 %s210, 1
      %s212 = scalar_select %p209, %s210, %s211
      %p215 = pneg %p209
      %p216 = scmp.eq.s32.totalorder %s17, 1
      %p217 = por %p215, %p216
      %p218 = scmp.ne.s32.totalorder %s210, %s213
      %p219 = scmp.eq.s32.totalorder %s17, 0
      %p220 = por %p218, %p219
      %p221 = scmp.ne.s32.totalorder %s210, %s213
      %p222 = scmp.eq.s32.totalorder %s22, 1
      %p223 = por %p221, %p222
      %p224 = scmp.ne.s32.totalorder %s213, %s214
      %p225 = scmp.eq.s32.totalorder %s22, 0
      %p226 = por %p224, %p225
      %p227 = scmp.ne.s32.totalorder %s213, %s214
      %p228 = scmp.eq.s32.totalorder %s23, 1
      %p229 = por %p227, %p228
      %p231 = scmp.ne.s32.totalorder %s214, %s230
      %p232 = scmp.eq.s32.totalorder %s23, 0
      %p233 = por %p231, %p232
      %p234 = scmp.le.s32.totalorder 1, %s17
      %p235 = scmp.lt.s32.totalorder %s17, 3
      %p236 = pnand %p234, %p235
      %p237 = pneg %p236
      // Predicated region
      $region9: #{_batched_predictor_impl.1} parent=5 // pred_check
        _
      $region10: #{_batched_predictor_impl.1} parent=5 // pred_check_branch
        %239 = sbr.rel (%p236) target = $region12
      $region11: #{_batched_predictor_impl.1} parent=5 // pred_region
        %s240 = ssub.s32 %s17, 1
        // Predicated region
        $region13: #{_batched_predictor_impl.1} parent=11 // pred_check
          %p241 = pneg %p116
        $region14: #{_batched_predictor_impl.1} parent=11 // pred_check_branch
          %243 = sbr.rel (%p241) target = $region16
        $region15: #{_batched_predictor_impl.1} parent=11 // pred_region
          _
        $region16: #{_batched_predictor_impl.1} parent=11 // pred_fallthru
          _
        // Predicated region
        $region17: #{_batched_predictor_impl.1} parent=11 // pred_check
          %p244 = pneg %p137
        $region18: #{_batched_predictor_impl.1} parent=11 // pred_check_branch
          %246 = sbr.rel (%p244) target = $region20
        $region19: #{_batched_predictor_impl.1} parent=11 // pred_region
          _
        $region20: #{_batched_predictor_impl.1} parent=11 // pred_fallthru
          _
        // Predicated region
        $region21: #{_batched_predictor_impl.1} parent=11 // pred_check
          %p247 = pneg %p158
        $region22: #{_batched_predictor_impl.1} parent=11 // pred_check_branch
          %249 = sbr.rel (%p247) target = $region24
        $region23: #{_batched_predictor_impl.1} parent=11 // pred_region
          _
        $region24: #{_batched_predictor_impl.1} parent=11 // pred_fallthru
          _
        // Predicated region
        $region25: #{_batched_predictor_impl.1} parent=11 // pred_check
          %p250 = pneg %p179
        $region26: #{_batched_predictor_impl.1} parent=11 // pred_check_branch
          %252 = sbr.rel (%p250) target = $region28
        $region27: #{_batched_predictor_impl.1} parent=11 // pred_region
          _
        $region28: #{_batched_predictor_impl.1} parent=11 // pred_fallthru
          _
        // Predicated region
        $region29: #{_batched_predictor_impl.1} parent=11 // pred_check
          %p253 = pneg %p200
        $region30: #{_batched_predictor_impl.1} parent=11 // pred_check_branch
          %255 = sbr.rel (%p253) target = $region32
        $region31: #{_batched_predictor_impl.1} parent=11 // pred_region
          _
        $region32: #{_batched_predictor_impl.1} parent=11 // pred_fallthru
          _
      $region12: #{_batched_predictor_impl.1} parent=5 // pred_fallthru
        _
      %p256 = scmp.lt.s32.totalorder %s17, 2
      // Predicated region
      $region33: #{_batched_predictor_impl.1} parent=5 // pred_check
        %p257 = pneg %p256
      $region34: #{_batched_predictor_impl.1} parent=5 // pred_check_branch
        %259 = sbr.rel (%p257) target = $region36
      $region35: #{_batched_predictor_impl.1} parent=5 // pred_region
        // Predicated region
        $region37: #{_batched_predictor_impl.1} parent=35 // pred_check
          %p260 = pneg %p37
        $region38: #{_batched_predictor_impl.1} parent=35 // pred_check_branch
          %262 = sbr.rel (%p260) target = $region40
        $region39: #{_batched_predictor_impl.1} parent=35 // pred_region
          %p263 = scmp.lt.s32.totalorder %s17, 1
          %s264 = scalar_select %p263, %s17, 1
          %s265 = scalar_lea.vmem %s0, %s264
        $region40: #{_batched_predictor_impl.1} parent=35 // pred_fallthru
          _
        // Predicated region
        $region41: #{_batched_predictor_impl.1} parent=35 // pred_check
          %p266 = pneg %p63
        $region42: #{_batched_predictor_impl.1} parent=35 // pred_check_branch
          %268 = sbr.rel (%p266) target = $region44
        $region43: #{_batched_predictor_impl.1} parent=35 // pred_region
          %p269 = scmp.lt.s32.totalorder %s17, 1
          %s270 = scalar_select %p269, %s17, 1
          %s271 = scalar_lea.vmem %s1, %s270
        $region44: #{_batched_predictor_impl.1} parent=35 // pred_fallthru
          _
        // Predicated region
        $region45: #{_batched_predictor_impl.1} parent=35 // pred_check
          %p272 = pneg %p89
        $region46: #{_batched_predictor_impl.1} parent=35 // pred_check_branch
          %274 = sbr.rel (%p272) target = $region48
        $region47: #{_batched_predictor_impl.1} parent=35 // pred_region
          %p275 = scmp.lt.s32.totalorder %s17, 1
          %s276 = scalar_select %p275, %s17, 1
          %s277 = smul.addr %s276, 4
          %s278 = scalar_lea.vmem %s2, %s277
        $region48: #{_batched_predictor_impl.1} parent=35 // pred_fallthru
          _
      $region36: #{_batched_predictor_impl.1} parent=5 // pred_fallthru
        _
      %p279 = scmp.le.s32.totalorder 1, %s17
      %p280 = scmp.lt.s32.totalorder %s17, 3
      %p281 = pnand %p279, %p280
      %p282 = pneg %p281
      // Predicated region
      $region49: #{_batched_predictor_impl.1} parent=5 // pred_check
        _
      $region50: #{_batched_predictor_impl.1} parent=5 // pred_check_branch
        %284 = sbr.rel (%p281) target = $region52
      $region51: #{_batched_predictor_impl.1} parent=5 // pred_region
        %s285 = ssub.s32 %s17, 1
        %p286 = scmp.lt.s32.totalorder %s22, 1
        %s287 = scalar_select %p286, %s22, 1
        %s288 = scalar_lea.vmem %s0, %s287
        %p289 = pneg %p43
        %p290 = pneg %p40
        %p291 = scmp.lt.s32.totalorder %s22, 1
        %s292 = scalar_select %p291, %s22, 1
        %s293 = scalar_lea.vmem %s1, %s292
        %p294 = pneg %p69
        %p295 = pneg %p66
        %p296 = scmp.lt.s32.totalorder %s22, 1
        %s297 = scalar_select %p296, %s22, 1
        %s298 = smul.addr %s297, 4
        %s299 = scalar_lea.vmem %s2, %s298
        %p300 = pneg %p95
        %p301 = pneg %p92
        %p302 = pneg %p116
        %p303 = pneg %p113
        %p304 = pneg %p137
        %p305 = pneg %p134
        %p306 = pneg %p158
        %p307 = pneg %p155
        %p308 = pneg %p179
        %p309 = pneg %p176
        %p310 = pneg %p200
        %p311 = pneg %p197
        %p312 = pneg %p226
        %p313 = pneg %p223
        %s314 = sand.u32 %s213, 1
        %s315 = scalar_lea.sflag [#allocation3], %s314
        %s316 = sand.u32 %s213, 1
        %s317 = smul.addr %s316, 4
        %s318 = scalar_lea.vmem [#allocation2], %s317
        %p319 = scmp.lt.s32.totalorder %s22, 1
        %s320 = scalar_select %p319, %s22, 1
        %s321 = scalar_lea.vmem %s0, %s320
        %p322 = scmp.lt.s32.totalorder %s22, 1
        %s323 = scalar_select %p322, %s22, 1
        %s324 = scalar_lea.vmem %s1, %s323
        %p325 = scmp.lt.s32.totalorder %s22, 1
        %s326 = scalar_select %p325, %s22, 1
        %s327 = smul.addr %s326, 4
        %s328 = scalar_lea.vmem %s2, %s327
        %v330 = vld [vmem:[%s321] sm:$0x1]
        %v331 = vld [vmem:[%s324] sm:$0x1]
        %v332 = vld [vmem:[%s328] sm:$0xf]
        %v333 = vlaneseq
        %v334 = vshrl.u32 %v333, 7
        %v335 = vadd.s32 %v334, 8
        %v336 = vlaneseq
        %v337 = vshrl.u32 %v336, 7
        %v338 = vsub.s32 0, %v337
        %v339 = vrot.slane %v330, %v338
        %vm340 = vcmp.eq.s32.totalorder %v334, %v339
        %vm341 = vcmp.eq.s32.totalorder %v335, %v339
        %v342 = vsel %vm340, 1, 0
        %v343 = vsel %vm341, 1, 0
        %v344 = vcvt.s32.f32 %v342
        %v345 = vcvt.s32.f32 %v343
        %v346 = vpack.c.bf16 %v345, %v344
        %v347 = vadd.s32 %v334, 16
        %v348 = vadd.s32 %v334, 24
        %v349 = vadd.s32 %v334, 32
        %v350 = vadd.s32 %v334, 40
        %v351 = vadd.s32 %v334, 48
        %v352 = vadd.s32 %v334, 56
        %v353 = vadd.s32 %v334, 64
        %v354 = vadd.s32 %v334, 72
        %v355 = vadd.s32 %v334, 80
        %v356 = vadd.s32 %v334, 88
        %v357 = vadd.s32 %v334, 96
        %v358 = vadd.s32 %v334, 104
        %v359 = vadd.s32 %v334, 112
        %v360 = vadd.s32 %v334, 120
        %v361 = vlaneseq
        %v362 = vshrl.u32 %v361, 7
        %v363 = vsub.s32 0, %v362
        %v364 = vrot.slane %v331, %v363
        %vm365 = vcmp.eq.s32.totalorder %v334, %v364
        %vm366 = vcmp.eq.s32.totalorder %v335, %v364
        %vm367 = vcmp.eq.s32.totalorder %v347, %v364
        %vm368 = vcmp.eq.s32.totalorder %v348, %v364
        %vm369 = vcmp.eq.s32.totalorder %v349, %v364
        %vm370 = vcmp.eq.s32.totalorder %v350, %v364
        %vm371 = vcmp.eq.s32.totalorder %v351, %v364
        %vm372 = vcmp.eq.s32.totalorder %v352, %v364
        %vm373 = vcmp.eq.s32.totalorder %v353, %v364
        %vm374 = vcmp.eq.s32.totalorder %v354, %v364
        %vm375 = vcmp.eq.s32.totalorder %v355, %v364
        %vm376 = vcmp.eq.s32.totalorder %v356, %v364
        %vm377 = vcmp.eq.s32.totalorder %v357, %v364
        %vm378 = vcmp.eq.s32.totalorder %v358, %v364
        %vm379 = vcmp.eq.s32.totalorder %v359, %v364
        %vm380 = vcmp.eq.s32.totalorder %v360, %v364
        %v381 = vsel %vm365, 1, 0
        %v382 = vsel %vm366, 1, 0
        %v383 = vsel %vm367, 1, 0
        %v384 = vsel %vm368, 1, 0
        %v385 = vsel %vm369, 1, 0
        %v386 = vsel %vm370, 1, 0
        %v387 = vsel %vm371, 1, 0
        %v388 = vsel %vm372, 1, 0
        %v389 = vsel %vm373, 1, 0
        %v390 = vsel %vm374, 1, 0
        %v391 = vsel %vm375, 1, 0
        %v392 = vsel %vm376, 1, 0
        %v393 = vsel %vm377, 1, 0
        %v394 = vsel %vm378, 1, 0
        %v395 = vsel %vm379, 1, 0
        %v396 = vsel %vm380, 1, 0
        %v397 = vcvt.s32.f32 %v381
        %v398 = vcvt.s32.f32 %v382
        %v399 = vcvt.s32.f32 %v383
        %v400 = vcvt.s32.f32 %v384
        %v401 = vcvt.s32.f32 %v385
        %v402 = vcvt.s32.f32 %v386
        %v403 = vcvt.s32.f32 %v387
        %v404 = vcvt.s32.f32 %v388
        %v405 = vcvt.s32.f32 %v389
        %v406 = vcvt.s32.f32 %v390
        %v407 = vcvt.s32.f32 %v391
        %v408 = vcvt.s32.f32 %v392
        %v409 = vcvt.s32.f32 %v393
        %v410 = vcvt.s32.f32 %v394
        %v411 = vcvt.s32.f32 %v395
        %v412 = vcvt.s32.f32 %v396
        %v413 = vpack.c.bf16 %v398, %v397
        %v414 = vpack.c.bf16 %v400, %v399
        %v415 = vpack.c.bf16 %v402, %v401
        %v416 = vpack.c.bf16 %v404, %v403
        %v417 = vpack.c.bf16 %v406, %v405
        %v418 = vpack.c.bf16 %v408, %v407
        %v419 = vpack.c.bf16 %v410, %v409
        %v420 = vpack.c.bf16 %v412, %v411
        %v421 = vld [vmem:[%s3] sm:$0xf]
        %vm422 = vcmask 130048
        %v424 = vsel %vm422, %v421, 0
        %426 = vmatprep.subr.bf16.mxu0 0
        %427 = vmatpush1.bf16.msra.mxu0 %v346
        %428 = vmatprep.subr.bf16.mxu0 0
        %429 = vmatpush1.bf16.msra.mxu0 0
        %430 = vmatprep.subr.bf16.mxu0 0
        %431 = vmatpush1.bf16.msra.mxu0 0
        %432 = vmatprep.subr.bf16.mxu0 0
        %433 = vmatpush1.bf16.msra.mxu0 0
        %434 = vmatprep.subr.bf16.mxu0 0
        %435 = vmatpush1.bf16.msra.mxu0 0
        %436 = vmatprep.subr.bf16.mxu0 0
        %437 = vmatpush1.bf16.msra.mxu0 0
        %438 = vmatprep.subr.bf16.mxu0 0
        %439 = vmatpush1.bf16.msra.mxu0 0
        %440 = vmatprep.subr.bf16.mxu0 0
        %441 = vmatpush1.bf16.msra.mxu0 0
        %442 = vmatprep.subr.bf16.mxu0 0
        %443 = vmatpush1.bf16.msra.mxu0 0
        %444 = vmatprep.subr.bf16.mxu0 0
        %445 = vmatpush1.bf16.msra.mxu0 0
        %446 = vmatprep.subr.bf16.mxu0 0
        %447 = vmatpush1.bf16.msra.mxu0 0
        %448 = vmatprep.subr.bf16.mxu0 0
        %449 = vmatpush1.bf16.msra.mxu0 0
        %450 = vmatprep.subr.bf16.mxu0 0
        %451 = vmatpush1.bf16.msra.mxu0 0
        %452 = vmatprep.subr.bf16.mxu0 0
        %453 = vmatpush1.bf16.msra.mxu0 0
        %454 = vmatprep.subr.bf16.mxu0 0
        %455 = vmatpush1.bf16.msra.mxu0 0
        %456 = vmatprep.subr.bf16.mxu0 0
        %457 = vmatpush1.bf16.msra.mxu0 0
        %458 = vmatprep.mubr.bf16.mxu0 0
        %459 = vmatmul.mubr.bf16.gmra.mrb[0].mxu0 %v424
        %v460 = vpop.f32.mrb[0].mxu0
        %v461 = vadd.f32 0.0, %v460
        %v462 = vpop.f32.mrb[0].mxu0
        %v463 = vpop.f32.mrb[0].mxu0
        %v464 = vpop.f32.mrb[0].mxu0
        %465 = vdwg.mxu0
        %466 = vmatprep.subr.bf16.mxu0 0
        %467 = vmatpush1.bf16.msra.mxu0 %v413
        %468 = vmatprep.subr.bf16.mxu0 0
        %469 = vmatpush1.bf16.msra.mxu0 %v414
        %470 = vmatprep.subr.bf16.mxu0 0
        %471 = vmatpush1.bf16.msra.mxu0 %v415
        %472 = vmatprep.subr.bf16.mxu0 0
        %473 = vmatpush1.bf16.msra.mxu0 %v416
        %474 = vmatprep.subr.bf16.mxu0 0
        %475 = vmatpush1.bf16.msra.mxu0 %v417
        %476 = vmatprep.subr.bf16.mxu0 0
        %477 = vmatpush1.bf16.msra.mxu0 %v418
        %478 = vmatprep.subr.bf16.mxu0 0
        %479 = vmatpush1.bf16.msra.mxu0 %v419
        %480 = vmatprep.subr.bf16.mxu0 0
        %481 = vmatpush1.bf16.msra.mxu0 %v420
        %482 = vmatprep.subr.bf16.mxu0 0
        %483 = vmatpush1.bf16.msra.mxu0 0
        %484 = vmatprep.subr.bf16.mxu0 0
        %485 = vmatpush1.bf16.msra.mxu0 0
        %486 = vmatprep.subr.bf16.mxu0 0
        %487 = vmatpush1.bf16.msra.mxu0 0
        %488 = vmatprep.subr.bf16.mxu0 0
        %489 = vmatpush1.bf16.msra.mxu0 0
        %490 = vmatprep.subr.bf16.mxu0 0
        %491 = vmatpush1.bf16.msra.mxu0 0
        %492 = vmatprep.subr.bf16.mxu0 0
        %493 = vmatpush1.bf16.msra.mxu0 0
        %494 = vmatprep.subr.bf16.mxu0 0
        %495 = vmatpush1.bf16.msra.mxu0 0
        %496 = vmatprep.subr.bf16.mxu0 0
        %497 = vmatpush1.bf16.msra.mxu0 0
        %498 = vmatprep.mubr.bf16.mxu0 0
        %499 = vmatmul.mubr.bf16.gmra.mrb[0].mxu0 %v332
        %v500 = vpop.f32.mrb[0].mxu0
        %v501 = vadd.f32 0.0, %v500
        %v502 = vpop.f32.mrb[0].mxu0
        %v503 = vpop.f32.mrb[0].mxu0
        %v504 = vpop.f32.mrb[0].mxu0
        %505 = vdwg.mxu0
        %v506 = vpack.c.bf16 %v501, %v461
        %v507 = vld [vmem:[%s4] sm:$0xf]
        %v508 = vld [vmem:[%s4 + $0x4] sm:$0xf]
        %v509 = vld [vmem:[%s4 + $0x8] sm:$0xf]
        %v510 = vld [vmem:[%s4 + $0xc] sm:$0xf]
        %v511 = vld [vmem:[%s5] sm:$0xff]
        %v512 = vld [vmem:[%s5 + $0x8] sm:$0xff]
        %v513 = vld [vmem:[%s5 + $0x10] sm:$0xff]
        %v514 = vld [vmem:[%s5 + $0x18] sm:$0xff]
        %516 = vset.pattern.permute.xlu0 0
        %517 = vperm.xlu0 %516, %v511
        %v518 = vpop.permute.xlu0 %517
        %521 = vset.pattern.permute.xlu0 0
        %522 = vperm.xlu0 %521, %v512
        %v523 = vpop.permute.xlu0 %522
        %526 = vset.pattern.permute.xlu0 0
        %527 = vperm.xlu0 %526, %v513
        %v528 = vpop.permute.xlu0 %527
        %531 = vset.pattern.permute.xlu0 0
        %532 = vperm.xlu0 %531, %v514
        %v533 = vpop.permute.xlu0 %532
        %v539 = vunpack.c.l.b16 %v507
        %v540 = vunpack.c.l.b16 %v508
        %v541 = vunpack.c.l.b16 %v509
        %v542 = vunpack.c.l.b16 %v510
        %v543 = vpack.c.b16 %v540, %v539
        %v544 = vpack.c.b16 %v542, %v541
        %v546 = vsel %vm422, %v543, 0
        %v549 = vsel %vm422, %v544, 0
        %551 = vmatprep.subr.bf16.mxu0 0
        %552 = vmatpush1.bf16.msra.mxu0 %v506
        %553 = vmatprep.subr.bf16.mxu0 0
        %554 = vmatpush1.bf16.msra.mxu0 0
        %555 = vmatprep.subr.bf16.mxu0 0
        %556 = vmatpush1.bf16.msra.mxu0 0
        %557 = vmatprep.subr.bf16.mxu0 0
        %558 = vmatpush1.bf16.msra.mxu0 0
        %559 = vmatprep.subr.bf16.mxu0 0
        %560 = vmatpush1.bf16.msra.mxu0 0
        %561 = vmatprep.subr.bf16.mxu0 0
        %562 = vmatpush1.bf16.msra.mxu0 0
        %563 = vmatprep.subr.bf16.mxu0 0
        %564 = vmatpush1.bf16.msra.mxu0 0
        %565 = vmatprep.subr.bf16.mxu0 0
        %566 = vmatpush1.bf16.msra.mxu0 0
        %567 = vmatprep.subr.bf16.mxu0 0
        %568 = vmatpush1.bf16.msra.mxu0 0
        %569 = vmatprep.subr.bf16.mxu0 0
        %570 = vmatpush1.bf16.msra.mxu0 0
        %571 = vmatprep.subr.bf16.mxu0 0
        %572 = vmatpush1.bf16.msra.mxu0 0
        %573 = vmatprep.subr.bf16.mxu0 0
        %574 = vmatpush1.bf16.msra.mxu0 0
        %575 = vmatprep.subr.bf16.mxu0 0
        %576 = vmatpush1.bf16.msra.mxu0 0
        %577 = vmatprep.subr.bf16.mxu0 0
        %578 = vmatpush1.bf16.msra.mxu0 0
        %579 = vmatprep.subr.bf16.mxu0 0
        %580 = vmatpush1.bf16.msra.mxu0 0
        %581 = vmatprep.subr.bf16.mxu0 0
        %582 = vmatpush1.bf16.msra.mxu0 0
        %583 = vmatprep.mubr.bf16.mxu0 0
        %584 = vmatmul.mubr.bf16.gmra.mrb[0].mxu0 %v546
        %v585 = vpop.f32.mrb[0].mxu0
        %v586 = vadd.f32 %v518, %v585
        %v587 = vpop.f32.mrb[0].mxu0
        %v588 = vpop.f32.mrb[0].mxu0
        %v589 = vadd.f32 %v523, %v588
        %v590 = vpop.f32.mrb[0].mxu0
        %591 = vmatprep.mubr.bf16.mxu0 0
        %592 = vmatmul.mubr.bf16.gmra.mrb[0].mxu0 %v549
        %v593 = vpop.f32.mrb[0].mxu0
        %v594 = vadd.f32 %v528, %v593
        %v595 = vpop.f32.mrb[0].mxu0
        %v596 = vpop.f32.mrb[0].mxu0
        %v597 = vadd.f32 %v533, %v596
        %v598 = vpop.f32.mrb[0].mxu0
        %599 = vdwg.mxu0
        %v600 = vmax.f32 %v586, 0.0
        %v601 = vmax.f32 %v589, 0.0
        %v602 = vmax.f32 %v594, 0.0
        %v603 = vmax.f32 %v597, 0.0
        %v604 = vpack.c.bf16 %v601, %v600
        %v605 = vpack.c.bf16 %v603, %v602
        %v606 = vld [vmem:[%s6] sm:$0x3]
        %v607 = vld [vmem:[%s7] sm:$0xf]
        %609 = vset.pattern.permute.xlu0 0
        %610 = vperm.xlu0 %609, %v607
        %v611 = vpop.permute.xlu0 %610
        %vm613 = vcmask 261120
        %v615 = vsel %vm613, %v606, 0
        %617 = vmatprep.subr.bf16.mxu0 0
        %618 = vmatpush1.bf16.msra.mxu0 %v604
        %619 = vmatprep.subr.bf16.mxu0 0
        %620 = vmatpush1.bf16.msra.mxu0 %v605
        %621 = vmatprep.subr.bf16.mxu0 0
        %622 = vmatpush1.bf16.msra.mxu0 0
        %623 = vmatprep.subr.bf16.mxu0 0
        %624 = vmatpush1.bf16.msra.mxu0 0
        %625 = vmatprep.subr.bf16.mxu0 0
        %626 = vmatpush1.bf16.msra.mxu0 0
        %627 = vmatprep.subr.bf16.mxu0 0
        %628 = vmatpush1.bf16.msra.mxu0 0
        %629 = vmatprep.subr.bf16.mxu0 0
        %630 = vmatpush1.bf16.msra.mxu0 0
        %631 = vmatprep.subr.bf16.mxu0 0
        %632 = vmatpush1.bf16.msra.mxu0 0
        %633 = vmatprep.subr.bf16.mxu0 0
        %634 = vmatpush1.bf16.msra.mxu0 0
        %635 = vmatprep.subr.bf16.mxu0 0
        %636 = vmatpush1.bf16.msra.mxu0 0
        %637 = vmatprep.subr.bf16.mxu0 0
        %638 = vmatpush1.bf16.msra.mxu0 0
        %639 = vmatprep.subr.bf16.mxu0 0
        %640 = vmatpush1.bf16.msra.mxu0 0
        %641 = vmatprep.subr.bf16.mxu0 0
        %642 = vmatpush1.bf16.msra.mxu0 0
        %643 = vmatprep.subr.bf16.mxu0 0
        %644 = vmatpush1.bf16.msra.mxu0 0
        %645 = vmatprep.subr.bf16.mxu0 0
        %646 = vmatpush1.bf16.msra.mxu0 0
        %647 = vmatprep.subr.bf16.mxu0 0
        %648 = vmatpush1.bf16.msra.mxu0 0
        %649 = vmatprep.mubr.bf16.mxu0 0
        %650 = vmatmul.mubr.bf16.gmra.mrb[0].mxu0 %v615
        %v651 = vpop.f32.mrb[0].mxu0
        %v652 = vadd.f32 %v611, %v651
        %v653 = vpop.f32.mrb[0].mxu0
        %v654 = vpop.f32.mrb[0].mxu0
        %v655 = vpop.f32.mrb[0].mxu0
        %656 = vdwg.mxu0
        %657 = vst [vmem:[%s318] sm:$0xf] %v652
        %s658 = sand.u32 %s213, 1
        %s659 = scalar_lea.sflag [#allocation3], %s658
        %s660 = sand.u32 %s213, 1
        %s661 = smul.addr %s660, 4
        %s662 = scalar_lea.vmem [#allocation2], %s661
        // Predicated region
        $region53: #{_batched_predictor_impl.1} parent=51 // pred_check
          %p663 = pneg %p223
        $region54: #{_batched_predictor_impl.1} parent=51 // pred_check_branch
          %665 = sbr.rel (%p663) target = $region56
        $region55: #{_batched_predictor_impl.1} parent=51 // pred_region
          %s667 = ssub.s32 64, 64
          %668 = vsyncadd %s659, %s667
          %s669 = smul.addr %s22, 64
          %s670 = scalar_lea.hbm %s8, %s669
          %s672 = sshll.u32 %s662, 4
          %s673 = int_to_ptr.vmem [resolvable:$true] %s672
          %675 = dma.vmem_to_hbm [thread:$0]  %s673, 64, %s670, %s659
        $region56: #{_batched_predictor_impl.1} parent=51 // pred_fallthru
          _
      $region52: #{_batched_predictor_impl.1} parent=5 // pred_fallthru
        _
      %p676 = scmp.le.s32.totalorder 2, %s17
      // Predicated region
      $region57: #{_batched_predictor_impl.1} parent=5 // pred_check
        %p677 = pneg %p676
      $region58: #{_batched_predictor_impl.1} parent=5 // pred_check_branch
        %679 = sbr.rel (%p677) target = $region60
      $region59: #{_batched_predictor_impl.1} parent=5 // pred_region
        %s680 = ssub.s32 %s17, 2
        // Predicated region
        $region61: #{_batched_predictor_impl.1} parent=59 // pred_check
          %p681 = pneg %p229
        $region62: #{_batched_predictor_impl.1} parent=59 // pred_check_branch
          %683 = sbr.rel (%p681) target = $region64
        $region63: #{_batched_predictor_impl.1} parent=59 // pred_region
          %s684 = sand.u32 %s214, 1
          %s685 = scalar_lea.sflag [#allocation3], %s684
          %s686 = sand.u32 %s214, 1
          %s687 = smul.addr %s686, 4
          %s688 = scalar_lea.vmem [#allocation2], %s687
          %689 = dma.done %s685, 64
        $region64: #{_batched_predictor_impl.1} parent=59 // pred_fallthru
          _
      $region60: #{_batched_predictor_impl.1} parent=5 // pred_fallthru
        _
    $region6: #{_batched_predictor_impl.1} parent=1 // loop_footer
      %s21 = sadd.s32 1, %s17
    $region7: #{_batched_predictor_impl.1} parent=1 // loop_footer_branch
      %16 = sbr.rel target = $region3
    $region8: #{_batched_predictor_impl.1} parent=1 // loop_exit
      _
    %690 = vsyncpa [#allocation3], 1
    %s691 = scalar_lea.sflag [#allocation3], 1
    %692 = vsyncpa %s691, 1

</llo_original>
